<compile_context>
chip_gen: v7x
topology: tpu7x:2x2x1
jax: 0.10.0
libtpu: 0.0.40
codegen_flags: <defaults>
</compile_context>

<pallas_src>
import math
from functools import partial

import jax
import jax.numpy as jnp
from jax.experimental import pallas as pl
from jax.experimental.pallas import tpu as pltpu

_LANE = 128


# ---------------------------------------------------------------------------
# Kernels
# ---------------------------------------------------------------------------
def _lora_kernel_single(x_ref, wa_ref, wb_ref, o_ref):
    # Whole reduction in one block: no scratch accumulator, write output directly.
    h = jnp.dot(x_ref[...].astype(wa_ref.dtype), wa_ref[...],
                preferred_element_type=jnp.float32)
    o_ref[...] = jnp.dot(h.astype(wb_ref.dtype), wb_ref[...],
                         preferred_element_type=jnp.float32).astype(o_ref.dtype)


def _lora_kernel_multi(x_ref, wa_ref, wb_ref, o_ref, h_acc, *, tk, wa_resident):
    # Grid: (M // tm, K // tk); K is the trailing (reduction, "arbitrary") axis.
    k = pl.program_id(1)

    @pl.when(k == 0)
    def _():
        h_acc[...] = jnp.zeros_like(h_acc)

    if wa_resident:
        # lora_A^T lives whole in VMEM; slice the current K chunk (no per-tile re-DMA).
        off = pl.multiple_of(k * tk, tk)
        wa_blk = wa_ref[pl.ds(off, tk), :]
    else:
        wa_blk = wa_ref[...]

    h_acc[...] += jnp.dot(x_ref[...].astype(wa_blk.dtype), wa_blk,
                          preferred_element_type=jnp.float32)

    @pl.when(k == pl.num_programs(1) - 1)
    def _():
        o_ref[...] = jnp.dot(h_acc[...].astype(wb_ref.dtype), wb_ref[...],
                             preferred_element_type=jnp.float32).astype(o_ref.dtype)


# ---------------------------------------------------------------------------
# Tiling helpers
# ---------------------------------------------------------------------------
def _round_up(v, m):
    return (v + m - 1) // m * m


def _vmem_capacity_bytes():
    try:
        cap = int(getattr(pltpu.get_tpu_info(), "vmem_capacity_bytes", 0) or 0)
        if cap:
            # Clamp to a sane per-TensorCore range in case the API reports per-chip totals.
            return max(32 << 20, min(cap, 128 << 20))
    except Exception:
        pass
    return 64 << 20  # conservative per-TC (v7x)


def _vmem_bytes(tm, tk, K, r_pad, N, x_bytes, w_bytes, out_bytes, wa_resident, multi_k):
    n_lane = _round_up(max(N, 1), _LANE)
    wa_rows = K if wa_resident else tk
    b = 2 * tm * tk * x_bytes                 # x tile (double-buffered)
    b += 2 * wa_rows * r_pad * w_bytes        # lora_A^T
    b += 2 * r_pad * n_lane * w_bytes         # lora_B^T (resident; budget 2 buffers)
    b += 2 * tm * n_lane * out_bytes          # output tile
    if multi_k:
        b += tm * r_pad * 4                   # f32 accumulator scratch
    return b


def _pick_tiles(M, K, r_pad, N, x_bytes, w_bytes, out_bytes, budget):
    row_align = 16 if x_bytes == 2 else 8     # bf16 sublane packing vs f32
    n_lane = _round_up(max(N, 1), _LANE)
    M_r = _round_up(max(M, 1), row_align)

    def max_tm(tk, wa_resident, multi_k):
        fixed = (2 * (K if wa_resident else tk) * r_pad * w_bytes
                 + 2 * r_pad * n_lane * w_bytes)
        per_tm = 2 * tk * x_bytes + 2 * n_lane * out_bytes + (4 * r_pad if multi_k else 0)
        avail = budget - fixed
        if avail <= 0:
            return 0
        return min((avail // per_tm) // row_align * row_align, 1024)

    # Option A: whole-K block (no reduction axis). Preferred unless it forces a tiny row tile.
    tm_a = max_tm(K, True, False)

    # Option B: K tiled with tk in [512, 2048] dividing K; lora_A^T stays VMEM-resident if small.
    use_single, wa_res_b, tm_b, tk_b = True, True, 0, 0
    if K % _LANE == 0 and K > 2048:
        for cand in range(2048, 511, -128):
            if K % cand == 0:
                tk_b = cand
                break
        if tk_b:
            wa_res_b = 2 * K * r_pad * w_bytes <= budget // 2
            tm_b = max_tm(tk_b, wa_res_b, True)
            if tm_a < min(256, M_r) and tm_b > max(tm_a, row_align):
                use_single = False

    if use_single:
        tm_cap, tk, wa_res, multi_k = max(tm_a, row_align), K, True, False
    else:
        tm_cap, tk, wa_res, multi_k = max(tm_b, row_align), tk_b, wa_res_b, True

    # Fit-aware tm: minimize M padding; keep >=2 row blocks when M is large (megacore).
    n_blocks = -(-M_r // tm_cap)
    if M_r >= 512:
        n_blocks = max(n_blocks, 2)
    tm = min(_round_up(-(-M_r // n_blocks), row_align), tm_cap)
    tm = max(tm, row_align)
    return tm, tk, wa_res, multi_k


# ---------------------------------------------------------------------------
# Weight packing (done once, cached by the module)
# ---------------------------------------------------------------------------
def pack_lora_weights(lora_A, lora_B, compute_dtype=jnp.float32):
    """lora_A: (r, in_dim), lora_B: (out_dim, r) -> wa: (in_dim, r_pad), wb: (r_pad, out_dim)."""
    r, K = lora_A.shape
    N, r2 = lora_B.shape
    assert r == r2
    r_pad = _round_up(max(r, 1), _LANE)
    wa = jnp.zeros((K, r_pad), compute_dtype).at[:, :r].set(lora_A.T.astype(compute_dtype))
    wb = jnp.zeros((r_pad, N), compute_dtype).at[:r, :].set(lora_B.T.astype(compute_dtype))
    return wa, wb


# ---------------------------------------------------------------------------
# Forward wrapper
# ---------------------------------------------------------------------------
def _lora_forward_packed(x, wa, wb, tile_override=None):
    """x: (..., in_dim); wa: (in_dim, r_pad); wb: (r_pad, out_dim). Returns (..., out_dim)."""
    x_dtype = x.dtype
    lead = x.shape[:-1]
    K = x.shape[-1]
    Kw, r_pad = wa.shape
    r_pad2, N = wb.shape
    assert K == Kw and r_pad == r_pad2

    M = math.prod(lead) if lead else 1
    x2d = x.reshape((M, K))

    x_bytes = int(jnp.dtype(x_dtype).itemsize)
    w_bytes = int(jnp.dtype(wa.dtype).itemsize)
    out_bytes = x_bytes

    cap = _vmem_capacity_bytes()
    budget = min(cap // 2, 64 << 20)

    if tile_override is not None:
        tm, tk, wa_res, multi_k = tile_override
    else:
        tm, tk, wa_res, multi_k = _pick_tiles(M, K, r_pad, N, x_bytes, w_bytes, out_bytes, budget)

    M_pad = _round_up(max(M, 1), tm)
    if M_pad != M:
        x2d = jnp.pad(x2d, ((0, M_pad - M), (0, 0)))
    gm = M_pad // tm

    est = _vmem_bytes(tm, tk, K, r_pad, N, x_bytes, w_bytes, out_bytes, wa_res, multi_k)
    vmem_limit = int(min(max(est + (16 << 20), 32 << 20), cap))

    flops = 2 * M_pad * K * r_pad + 2 * M_pad * r_pad * N
    bytes_accessed = (M_pad * K * x_bytes + wa.size * w_bytes + wb.size * w_bytes
                      + M_pad * N * out_bytes)
    cost = pl.CostEstimate(flops=int(flops), transcendentals=0,
                           bytes_accessed=int(bytes_accessed))

    if not multi_k:
        kernel = _lora_kernel_single
        grid = (gm,)
        in_specs = [
            pl.BlockSpec((tm, K), lambda i: (i, 0)),
            pl.BlockSpec((K, r_pad), lambda i: (0, 0)),
            pl.BlockSpec((r_pad, N), lambda i: (0, 0)),
        ]
        out_specs = pl.BlockSpec((tm, N), lambda i: (i, 0))
        scratch_shapes = []
        dim_sem = ("parallel",)
    else:
        gk = K // tk
        kernel = partial(_lora_kernel_multi, tk=tk, wa_resident=wa_res)
        grid = (gm, gk)
        if wa_res:
            wa_spec = pl.BlockSpec((K, r_pad), lambda i, k: (0, 0))   # fetched once, resident
        else:
            wa_spec = pl.BlockSpec((tk, r_pad), lambda i, k: (k, 0))
        in_specs = [
            pl.BlockSpec((tm, tk), lambda i, k: (i, k)),
            wa_spec,
            pl.BlockSpec((r_pad, N), lambda i, k: (0, 0)),
        ]
        out_specs = pl.BlockSpec((tm, N), lambda i, k: (i, 0))
        scratch_shapes = [pltpu.VMEM((tm, r_pad), jnp.float32)]
        dim_sem = ("parallel", "arbitrary")

    out = pl.pallas_call(
        kernel,
        out_shape=jax.ShapeDtypeStruct((M_pad, N), x_dtype),
        grid_spec=pltpu.PrefetchScalarGridSpec(
            num_scalar_prefetch=0,
            grid=grid,
            in_specs=in_specs,
            out_specs=out_specs,
            scratch_shapes=scratch_shapes,
        ),
        compiler_params=pltpu.CompilerParams(
            dimension_semantics=dim_sem,
            vmem_limit_bytes=vmem_limit,
        ),
        cost_estimate=cost,
    )(x2d, wa, wb)

    if M_pad != M:
        out = out[:M]
    return out.reshape(lead + (N,))


def lora_projection(x, lora_A, lora_B, *, allow_low_precision=False):
    """Standalone functional API (packs weights per call; prefer LoraProjectionPallas)."""
    compute_dtype = (jnp.bfloat16
                     if (allow_low_precision and x.dtype == jnp.bfloat16) else jnp.float32)
    wa, wb = pack_lora_weights(lora_A, lora_B, compute_dtype)
    return _lora_forward_packed(x, wa, wb)


# ---------------------------------------------------------------------------
# Module
# ---------------------------------------------------------------------------
def _kaiming_uniform(key, shape, dtype=jnp.float32):
    # torch.nn.init.kaiming_uniform_(w, a=sqrt(5)) on a 2-D weight (out, in):
    # bound = sqrt(6 / ((1 + a^2) * fan_in)) = 1 / sqrt(fan_in), fan_in = shape[1]
    bound = 1.0 / math.sqrt(shape[1])
    return jax.random.uniform(key, shape, dtype=dtype, minval=-bound, maxval=bound)


class LoraProjectionPallas:
    def __init__(self, in_dim, low_rank_dim, out_dim, key, allow_low_precision=False):
        ka, kb = jax.random.split(key)
        self.lora_A = _kaiming_uniform(ka, (low_rank_dim, in_dim))   # (r, in_dim)
        self.lora_B = _kaiming_uniform(kb, (out_dim, low_rank_dim))  # (out_dim, r)
        self.allow_low_precision = allow_low_precision
        # Pre-pack transposed / rank-padded weights once (no per-call transpose+pad pass).
        self._wa_f32, self._wb_f32 = pack_lora_weights(self.lora_A, self.lora_B, jnp.float32)
        if allow_low_precision:
            self._wa_bf16, self._wb_bf16 = pack_lora_weights(self.lora_A, self.lora_B,
                                                             jnp.bfloat16)
        else:
            self._wa_bf16 = self._wb_bf16 = None

    def __call__(self, x):
        if self.allow_low_precision and x.dtype == jnp.bfloat16:
            # Gated fast path: bf16 MXU operands, f32 accumulation.
            return _lora_forward_packed(x, self._wa_bf16, self._wb_bf16)
        # Default: matches the PyTorch module exactly (f32 compute, cast back to x.dtype).
        return _lora_forward_packed(x, self._wa_f32, self._wb_f32)


# ---------------------------------------------------------------------------
# Demo / self-check
# ---------------------------------------------------------------------------
def _reference(x, lora_A, lora_B):
    x32 = x.astype(jnp.float32)
    h = jnp.matmul(x32, lora_A.astype(jnp.float32).T, precision=jax.lax.Precision.HIGHEST)
    y = jnp.matmul(h, lora_B.astype(jnp.float32).T, precision=jax.lax.Precision.HIGHEST)
    return y.astype(x.dtype)


if __name__ == "__main__":
    key = jax.random.PRNGKey(0)
    k1, k2, k3, k4, k5, k6 = jax.random.split(key, 6)

    # Primary small example: batch=2, seq=8, in_dim=32, r=8, out_dim=16.
    batch, seq, in_dim, low_rank_dim, out_dim = 2, 8, 32, 8, 16
    layer = LoraProjectionPallas(in_dim, low_rank_dim, out_dim, k1)
    x = jax.random.normal(k2, (batch, seq, in_dim), dtype=jnp.float32)
    out = jax.block_until_ready(layer(x))
    ref = _reference(x, layer.lora_A, layer.lora_B)
    assert out.shape == (batch, seq, out_dim)
    assert jnp.allclose(out, ref, atol=1e-4, rtol=1e-4)

    # Non-divisible shapes (exercises M padding + unpadded out_dim path).
    layer2 = LoraProjectionPallas(96, 4, 40, k3)
    x2 = jax.random.normal(k4, (3, 50, 96), dtype=jnp.float32)
    out2 = jax.block_until_ready(layer2(x2))
    ref2 = _reference(x2, layer2.lora_A, layer2.lora_B)
    assert out2.shape == (3, 50, 40)
    assert jnp.allclose(out2, ref2, atol=1e-4, rtol=1e-4)

    # bf16 input, default path: upcast to f32 in-kernel, output cast back to bf16.
    x3 = jax.random.normal(k5, (batch, seq, in_dim), dtype=jnp.bfloat16)
    out3 = jax.block_until_ready(layer(x3))
    ref3 = _reference(x3, layer.lora_A, layer.lora_B)
    assert out3.dtype == jnp.bfloat16
    assert jnp.allclose(out3.astype(jnp.float32), ref3.astype(jnp.float32),
                        atol=2e-2, rtol=2e-2)

    # bf16 input, gated low-precision fast path (bf16 MXU operands, f32 accumulation).
    layer_fast = LoraProjectionPallas(in_dim, low_rank_dim, out_dim, k1,
                                      allow_low_precision=True)
    out3f = jax.block_until_ready(layer_fast(x3))
    assert out3f.dtype == jnp.bfloat16
    assert jnp.allclose(out3f.astype(jnp.float32), ref3.astype(jnp.float32),
                        atol=5e-2, rtol=5e-2)

    # Force the multi-K (reduction-axis) kernel variants at tiny shapes so both paths are
    # compile- and correctness-checked on device (resident wa and tiled wa).
    layer3 = LoraProjectionPallas(256, 8, 64, k6)
    x4 = jax.random.normal(k2, (2, 16, 256), dtype=jnp.float32)
    ref4 = _reference(x4, layer3.lora_A, layer3.lora_B)
    wa3, wb3 = layer3._wa_f32, layer3._wb_f32
    out4a = jax.block_until_ready(
        _lora_forward_packed(x4, wa3, wb3, tile_override=(32, 128, True, True)))
    out4b = jax.block_until_ready(
        _lora_forward_packed(x4, wa3, wb3, tile_override=(32, 128, False, True)))
    assert jnp.allclose(out4a, ref4, atol=1e-4, rtol=1e-4)
    assert jnp.allclose(out4b, ref4, atol=1e-4, rtol=1e-4)

    print("KERNEL_OK")
</pallas_src>

<mosaic_0001>
module attributes {stable_mosaic.version = 11 : i64} {
  func.func @_lora_kernel_single(%arg0: i32, %arg1: memref<16x32xf32, #tpu.memory_space<vmem>>, %arg2: memref<32x128xf32, #tpu.memory_space<vmem>>, %arg3: memref<128x16xf32, #tpu.memory_space<vmem>>, %arg4: memref<16x16xf32, #tpu.memory_space<vmem>>) attributes {dimension_semantics = [#tpu.dimension_semantics<parallel>], iteration_bounds = array<i64: 1>, scalar_prefetch = 0 : i64, scratch_operands = 0 : i64, tpu.core_type = #tpu.core_type<tc>, window_params = [{transform_indices = @transform_0, window_bounds = array<i64: 16, 32>}, {pipeline_mode = #tpu.pipeline_mode<synchronous>, transform_indices = @transform_1, window_bounds = array<i64: 32, 128>}, {pipeline_mode = #tpu.pipeline_mode<synchronous>, transform_indices = @transform_2, window_bounds = array<i64: 128, 16>}, {transform_indices = @transform_3, window_bounds = array<i64: 16, 16>}]} {
    %c0 = arith.constant 0 : index
    %c0_0 = arith.constant 0 : index
    %0 = vector.load %arg1[%c0, %c0_0] : memref<16x32xf32, #tpu.memory_space<vmem>>, vector<16x32xf32>
    %c0_1 = arith.constant 0 : index
    %c0_2 = arith.constant 0 : index
    %1 = vector.load %arg2[%c0_1, %c0_2] : memref<32x128xf32, #tpu.memory_space<vmem>>, vector<32x128xf32>
    %cst = arith.constant dense<0.000000e+00> : vector<16x128xf32>
    %2 = tpu.matmul %0, %1, %cst {dimension_numbers = #tpu.dot_dimension_numbers<[1], [0], [0], [1], [0, 0, 1, 1], [], []>} : vector<16x32xf32>, vector<32x128xf32>, vector<16x128xf32> -> vector<16x128xf32>
    %c0_3 = arith.constant 0 : index
    %c0_4 = arith.constant 0 : index
    %3 = vector.load %arg3[%c0_3, %c0_4] : memref<128x16xf32, #tpu.memory_space<vmem>>, vector<128x16xf32>
    %cst_5 = arith.constant dense<0.000000e+00> : vector<16x16xf32>
    %4 = tpu.matmul %2, %3, %cst_5 {dimension_numbers = #tpu.dot_dimension_numbers<[1], [0], [0], [1], [0, 0, 1, 1], [], []>} : vector<16x128xf32>, vector<128x16xf32>, vector<16x16xf32> -> vector<16x16xf32>
    %c0_6 = arith.constant 0 : index
    %c0_7 = arith.constant 0 : index
    %5 = vector.load %arg4[%c0_6, %c0_7] : memref<16x16xf32, #tpu.memory_space<vmem>>, vector<16x16xf32>
    tpu.vector_store %arg4[%c0_6, %c0_7], %4 {strides = array<i32>} : memref<16x16xf32, #tpu.memory_space<vmem>>, vector<16x16xf32>,
    return
  }
  func.func @transform_0(%arg0: i32) -> (i32, i32) {
    %c0_i32 = arith.constant 0 : i32
    %c0_i32_0 = arith.constant 0 : i32
    return %arg0, %c0_i32 : i32, i32
  }
  func.func @transform_1(%arg0: i32) -> (i32, i32) {
    %c0_i32 = arith.constant 0 : i32
    %c0_i32_0 = arith.constant 0 : i32
    %c0_i32_1 = arith.constant 0 : i32
    return %c0_i32, %c0_i32_0 : i32, i32
  }
  func.func @transform_2(%arg0: i32) -> (i32, i32) {
    %c0_i32 = arith.constant 0 : i32
    %c0_i32_0 = arith.constant 0 : i32
    %c0_i32_1 = arith.constant 0 : i32
    return %c0_i32, %c0_i32_0 : i32, i32
  }
  func.func @transform_3(%arg0: i32) -> (i32, i32) {
    %c0_i32 = arith.constant 0 : i32
    %c0_i32_0 = arith.constant 0 : i32
    return %arg0, %c0_i32 : i32, i32
  }
}

</mosaic_0001>

<llo_original>
// kernel: tpu_custom_call.1
$region0: #{tpu_custom_call.1}
  #allocation0 [shape = 'u32[]', space=smem, size = 0x4, offset = 0x4, fixed_abs, tag = 'smem constant byte address 0x4 - core index']
  #allocation1 [shape = 'u32[144,128]{1,0:T(1,128)}', space=vmem, size = 0x12000, scoped, tag = 'internal scratch']
  %s0 = inlined_call_operand.vmem [shape: f32[16,32], index: 0, kind: input, shape index: {}]
  %s1 = inlined_call_operand.vmem [shape: f32[32,128], index: 1, kind: input, shape index: {}]
  %s2 = inlined_call_operand.vmem [shape: f32[128,16], index: 2, kind: input, shape index: {}]
  %s3 = inlined_call_operand.hbm [shape: f32[16,16], index: 3, kind: output, shape index: {}]
  %s4 = sld [smem:[#allocation0]]
  $region22: #{tpu_custom_call.1} parent=0
    _
  %s6 = ssub.s32 1, %s4
  %s7 = scalar_select 0, %s6, %s4
  $region1: #{tpu_custom_call.1} parent=0
    #allocation2 [shape = 'u8[8192]{0}', space=vmem, size = 0x2000, scoped, tag = 'output window, operand 0, single buffered']
    #allocation3 [shape = 's32[1]{0}', space=sflag, size = 0x4, scoped, tag = 'scoped memory for tpu_custom_call.1']
    %8 = vsyncpa [#allocation3], 0
    // Predicated region
    $region2: #{tpu_custom_call.1} parent=1 // pred_check
      _
    $region3: #{tpu_custom_call.1} parent=1 // pred_check_branch
      %10 = sbr.rel (0) target = $region5
    $region4: #{tpu_custom_call.1} parent=1 // pred_region
      _
    $region5: #{tpu_custom_call.1} parent=1 // pred_fallthru
      _
    // Predicated region
    $region6: #{tpu_custom_call.1} parent=1 // pred_check
      _
    $region7: #{tpu_custom_call.1} parent=1 // pred_check_branch
      %12 = sbr.rel (0) target = $region9
    $region8: #{tpu_custom_call.1} parent=1 // pred_region
      _
    $region9: #{tpu_custom_call.1} parent=1 // pred_fallthru
      _
    // Predicated region
    $region10: #{tpu_custom_call.1} parent=1 // pred_check
      _
    $region11: #{tpu_custom_call.1} parent=1 // pred_check_branch
      %14 = sbr.rel (0) target = $region13
    $region12: #{tpu_custom_call.1} parent=1 // pred_region
      _
    $region13: #{tpu_custom_call.1} parent=1 // pred_fallthru
      _
    %v15 = vld [vmem:[%s0] sm:$0xff]
    %v16 = vld [vmem:[%s0 + $0x8] sm:$0xff]
    %v17 = vld [vmem:[%s1] sm:$0xff]
    %v18 = vld [vmem:[%s1 + $0x8] sm:$0xff]
    %v19 = vld [vmem:[%s1 + $0x10] sm:$0xff]
    %v20 = vld [vmem:[%s1 + $0x18] sm:$0xff]
    %vm21 = vcmask 261120
    %v23 = vsel %vm21, %v15, 0
    %v26 = vsel %vm21, %v16, 0
    %28 = vmatprep.subr.mxu0 0.0
    %29 = vmatpush1.msra.mxu0 %v17
    %30 = vmatprep.subr.mxu0 0.0
    %31 = vmatpush1.msra.mxu0 %v18
    %32 = vmatprep.subr.mxu0 0.0
    %33 = vmatpush1.msra.mxu0 %v19
    %34 = vmatprep.subr.mxu0 0.0
    %35 = vmatpush1.msra.mxu0 %v20
    %36 = vmatprep.subr.mxu0 0.0
    %37 = vmatpush1.msra.mxu0 0.0
    %38 = vmatprep.subr.mxu0 0.0
    %39 = vmatpush1.msra.mxu0 0.0
    %40 = vmatprep.subr.mxu0 0.0
    %41 = vmatpush1.msra.mxu0 0.0
    %42 = vmatprep.subr.mxu0 0.0
    %43 = vmatpush1.msra.mxu0 0.0
    %44 = vmatprep.subr.mxu0 0.0
    %45 = vmatpush1.msra.mxu0 0.0
    %46 = vmatprep.subr.mxu0 0.0
    %47 = vmatpush1.msra.mxu0 0.0
    %48 = vmatprep.subr.mxu0 0.0
    %49 = vmatpush1.msra.mxu0 0.0
    %50 = vmatprep.subr.mxu0 0.0
    %51 = vmatpush1.msra.mxu0 0.0
    %52 = vmatprep.subr.mxu0 0.0
    %53 = vmatpush1.msra.mxu0 0.0
    %54 = vmatprep.subr.mxu0 0.0
    %55 = vmatpush1.msra.mxu0 0.0
    %56 = vmatprep.subr.mxu0 0.0
    %57 = vmatpush1.msra.mxu0 0.0
    %58 = vmatprep.subr.mxu0 0.0
    %59 = vmatpush1.msra.mxu0 0.0
    %60 = vmatprep.subr.mxu0 0.0
    %61 = vmatpush1.msra.mxu0 0.0
    %62 = vmatprep.subr.mxu0 0.0
    %63 = vmatpush1.msra.mxu0 0.0
    %64 = vmatprep.subr.mxu0 0.0
    %65 = vmatpush1.msra.mxu0 0.0
    %66 = vmatprep.subr.mxu0 0.0
    %67 = vmatpush1.msra.mxu0 0.0
    %68 = vmatprep.subr.mxu0 0.0
    %69 = vmatpush1.msra.mxu0 0.0
    %70 = vmatprep.subr.mxu0 0.0
    %71 = vmatpush1.msra.mxu0 0.0
    %72 = vmatprep.subr.mxu0 0.0
    %73 = vmatpush1.msra.mxu0 0.0
    %74 = vmatprep.subr.mxu0 0.0
    %75 = vmatpush1.msra.mxu0 0.0
    %76 = vmatprep.subr.mxu0 0.0
    %77 = vmatpush1.msra.mxu0 0.0
    %78 = vmatprep.subr.mxu0 0.0
    %79 = vmatpush1.msra.mxu0 0.0
    %80 = vmatprep.subr.mxu0 0.0
    %81 = vmatpush1.msra.mxu0 0.0
    %82 = vmatprep.subr.mxu0 0.0
    %83 = vmatpush1.msra.mxu0 0.0
    %84 = vmatprep.subr.mxu0 0.0
    %85 = vmatpush1.msra.mxu0 0.0
    %86 = vmatprep.subr.mxu0 0.0
    %87 = vmatpush1.msra.mxu0 0.0
    %88 = vmatprep.subr.mxu0 0.0
    %89 = vmatpush1.msra.mxu0 0.0
    %90 = vmatprep.subr.mxu0 0.0
    %91 = vmatpush1.msra.mxu0 0.0
    %92 = vmatprep.mubr.f32.mxu0 0.0
    %93 = vmatmul.mubr.f32.gmra.mrb[0].mxu0 %v23
    %v94 = vpop.f32.mrb[0].mxu0
    %v95 = vadd.f32 0.0, %v94
    %v96 = vpop.f32.mrb[0].mxu0
    %97 = vmatprep.mubr.f32.mxu0 0.0
    %98 = vmatmul.mubr.f32.gmra.mrb[0].mxu0 %v26
    %v99 = vpop.f32.mrb[0].mxu0
    %v100 = vadd.f32 0.0, %v99
    %v101 = vpop.f32.mrb[0].mxu0
    %102 = vdwg.mxu0
    %v103 = vld [vmem:[%s2] sm:$0xff]
    %v104 = vld [vmem:[%s2 + $0x8] sm:$0xff]
    %v105 = vld [vmem:[%s2 + $0x10] sm:$0xff]
    %v106 = vld [vmem:[%s2 + $0x18] sm:$0xff]
    %v107 = vld [vmem:[%s2 + $0x20] sm:$0xff]
    %v108 = vld [vmem:[%s2 + $0x28] sm:$0xff]
    %v109 = vld [vmem:[%s2 + $0x30] sm:$0xff]
    %v110 = vld [vmem:[%s2 + $0x38] sm:$0xff]
    %v111 = vld [vmem:[%s2 + $0x40] sm:$0xff]
    %v112 = vld [vmem:[%s2 + $0x48] sm:$0xff]
    %v113 = vld [vmem:[%s2 + $0x50] sm:$0xff]
    %v114 = vld [vmem:[%s2 + $0x58] sm:$0xff]
    %v115 = vld [vmem:[%s2 + $0x60] sm:$0xff]
    %v116 = vld [vmem:[%s2 + $0x68] sm:$0xff]
    %v117 = vld [vmem:[%s2 + $0x70] sm:$0xff]
    %v118 = vld [vmem:[%s2 + $0x78] sm:$0xff]
    %119 = vmatprep.subr.mxu0 0.0
    %120 = vmatpush1.msra.mxu0 %v103
    %121 = vmatprep.subr.mxu0 0.0
    %122 = vmatpush1.msra.mxu0 %v104
    %123 = vmatprep.subr.mxu0 0.0
    %124 = vmatpush1.msra.mxu0 %v105
    %125 = vmatprep.subr.mxu0 0.0
    %126 = vmatpush1.msra.mxu0 %v106
    %127 = vmatprep.subr.mxu0 0.0
    %128 = vmatpush1.msra.mxu0 %v107
    %129 = vmatprep.subr.mxu0 0.0
    %130 = vmatpush1.msra.mxu0 %v108
    %131 = vmatprep.subr.mxu0 0.0
    %132 = vmatpush1.msra.mxu0 %v109
    %133 = vmatprep.subr.mxu0 0.0
    %134 = vmatpush1.msra.mxu0 %v110
    %135 = vmatprep.subr.mxu0 0.0
    %136 = vmatpush1.msra.mxu0 %v111
    %137 = vmatprep.subr.mxu0 0.0
    %138 = vmatpush1.msra.mxu0 %v112
    %139 = vmatprep.subr.mxu0 0.0
    %140 = vmatpush1.msra.mxu0 %v113
    %141 = vmatprep.subr.mxu0 0.0
    %142 = vmatpush1.msra.mxu0 %v114
    %143 = vmatprep.subr.mxu0 0.0
    %144 = vmatpush1.msra.mxu0 %v115
    %145 = vmatprep.subr.mxu0 0.0
    %146 = vmatpush1.msra.mxu0 %v116
    %147 = vmatprep.subr.mxu0 0.0
    %148 = vmatpush1.msra.mxu0 %v117
    %149 = vmatprep.subr.mxu0 0.0
    %150 = vmatpush1.msra.mxu0 %v118
    %151 = vmatprep.subr.mxu0 0.0
    %152 = vmatpush1.msra.mxu0 0.0
    %153 = vmatprep.subr.mxu0 0.0
    %154 = vmatpush1.msra.mxu0 0.0
    %155 = vmatprep.subr.mxu0 0.0
    %156 = vmatpush1.msra.mxu0 0.0
    %157 = vmatprep.subr.mxu0 0.0
    %158 = vmatpush1.msra.mxu0 0.0
    %159 = vmatprep.subr.mxu0 0.0
    %160 = vmatpush1.msra.mxu0 0.0
    %161 = vmatprep.subr.mxu0 0.0
    %162 = vmatpush1.msra.mxu0 0.0
    %163 = vmatprep.subr.mxu0 0.0
    %164 = vmatpush1.msra.mxu0 0.0
    %165 = vmatprep.subr.mxu0 0.0
    %166 = vmatpush1.msra.mxu0 0.0
    %167 = vmatprep.subr.mxu0 0.0
    %168 = vmatpush1.msra.mxu0 0.0
    %169 = vmatprep.subr.mxu0 0.0
    %170 = vmatpush1.msra.mxu0 0.0
    %171 = vmatprep.subr.mxu0 0.0
    %172 = vmatpush1.msra.mxu0 0.0
    %173 = vmatprep.subr.mxu0 0.0
    %174 = vmatpush1.msra.mxu0 0.0
    %175 = vmatprep.subr.mxu0 0.0
    %176 = vmatpush1.msra.mxu0 0.0
    %177 = vmatprep.subr.mxu0 0.0
    %178 = vmatpush1.msra.mxu0 0.0
    %179 = vmatprep.subr.mxu0 0.0
    %180 = vmatpush1.msra.mxu0 0.0
    %181 = vmatprep.subr.mxu0 0.0
    %182 = vmatpush1.msra.mxu0 0.0
    %183 = vmatprep.mubr.f32.mxu0 0.0
    %184 = vmatmul.mubr.f32.gmra.mrb[0].mxu0 %v95
    %v185 = vpop.f32.mrb[0].mxu0
    %v186 = vadd.f32 0.0, %v185
    %v187 = vpop.f32.mrb[0].mxu0
    %188 = vmatprep.mubr.f32.mxu0 0.0
    %189 = vmatmul.mubr.f32.gmra.mrb[0].mxu0 %v100
    %v190 = vpop.f32.mrb[0].mxu0
    %v191 = vadd.f32 0.0, %v190
    %v192 = vpop.f32.mrb[0].mxu0
    %193 = vdwg.mxu0
    %vm194 = vcmask 130048
    %195 = vst.msk [vmem:[#allocation2] sm:$0xff] %vm194, %v186
    %196 = vst.msk [vmem:[#allocation2 + $0x8] sm:$0xff] %vm194, %v191
    // Predicated region
    $region14: #{tpu_custom_call.1} parent=1 // pred_check
      _
    $region15: #{tpu_custom_call.1} parent=1 // pred_check_branch
      %198 = sbr.rel (0) target = $region17
    $region16: #{tpu_custom_call.1} parent=1 // pred_region
      %s200 = ssub.s32 256, 256
      %201 = vsyncadd [#allocation3], %s200
      %s202 = sshll.u32 [#allocation2], 4
      %s203 = int_to_ptr.vmem [resolvable:$true] %s202
      %208 = dma.vmem_to_hbm [thread:$0]  %s203, 256, %s3, [#allocation3], 128, 128, 8
    $region17: #{tpu_custom_call.1} parent=1 // pred_fallthru
      _
    // Predicated region
    $region18: #{tpu_custom_call.1} parent=1 // pred_check
      _
    $region19: #{tpu_custom_call.1} parent=1 // pred_check_branch
      %210 = sbr.rel (0) target = $region21
    $region20: #{tpu_custom_call.1} parent=1 // pred_region
      %211 = dma.done [#allocation3], 256
    $region21: #{tpu_custom_call.1} parent=1 // pred_fallthru
      _
    %212 = vsyncpa [#allocation3], 1

</llo_original>
